<compile_context>
chip_gen: v5e
topology: v5e:2x2
jax: 0.10.0
libtpu: 0.0.40
codegen_flags: <defaults>
</compile_context>

<pallas_src>
import jax
import jax.numpy as jnp
from jax import lax
from jax.experimental import pallas as pl
from jax.experimental.pallas import tpu as pltpu


# -------------------- pltpu.roll direction self-check ---------------------- #
_ROLL_MATCHES_JNP = None


def _roll_matches_jnp_semantics():
    """One-time probe that locks pltpu.roll's shift direction to jnp.roll.

    Runs a single tiny (8,128) kernel once (memoized); keeps the main kernel
    correct even if the backend's rotate convention ever differs.
    """
    global _ROLL_MATCHES_JNP
    if _ROLL_MATCHES_JNP is None:
        def k(x_ref, o_ref):
            o_ref[...] = pltpu.roll(x_ref[...], 1, 1)

        x = jnp.broadcast_to(lax.iota(jnp.float32, 128), (8, 128))
        y = pl.pallas_call(
            k, out_shape=jax.ShapeDtypeStruct((8, 128), jnp.float32))(x)
        _ROLL_MATCHES_JNP = bool(jnp.array_equal(y, jnp.roll(x, 1, axis=1)))
    return _ROLL_MATCHES_JNP


# ----------------------------- Pallas kernel ------------------------------ #
def _make_kernel(H, W, C, Cc, Hd, depth, k_used, k_pad, roll_like_jnp):
    """Builds the fused BasicStage kernel for one image (channel-major).

    x_ref  : (1, C, H*W)        f32   input (residual source), lane-dense
    wm_ref : (depth, Hd, k_pad) bf16  merged conv1 weight: 3x3 folded in,
                                      untouched-channel rows appended, BN
                                      scale folded, K zero-padded to k_pad
    w2_ref : (depth, C, Hd)     bf16  1x1 conv #2 (transposed for (C,HW) out)
    bi_ref : (depth, Hd, 1)     f32   folded BatchNorm bias (eval mode)
    o_ref  : (1, C, H*W)        f32   output, lane-dense
    stage  : (k_pad, H*W)       bf16  VMEM staging operand for the merged K
    """
    HW = H * W
    taps = [(dy - 1, dx - 1) for dy in range(3) for dx in range(3)]

    def kernel(x_ref, wm_ref, w2_ref, bi_ref, o_ref, stage_ref):
        # Zero only the K-padding rows, once per image (never written again;
        # matching weight rows are zero, but scratch VMEM is uninitialized).
        if k_pad > k_used:
            stage_ref[pl.ds(k_used, k_pad - k_used), :] = jnp.zeros(
                (k_pad - k_used, HW), jnp.bfloat16)

        # Border masks for the 3x3 taps (hoisted out of all loops).
        lane = lax.broadcasted_iota(jnp.int32, (Cc, HW), 1)
        row, col = lane // W, lane % W
        row_ok = {-1: row >= 1, 0: None, 1: row < H - 1}
        col_ok = {-1: col >= 1, 0: None, 1: col < W - 1}

        xf = x_ref[0]                                # (C, HW) f32 residual

        for d in range(depth):                       # static unroll of blocks
            xc = xf[:Cc, :].astype(jnp.bfloat16)     # conv channels  (Cc, HW)
            xu = xf[Cc:, :].astype(jnp.bfloat16)     # untouched    (C-Cc, HW)

            # ---- Partial_conv3 (3x3, pad=1): tap (oy,ox) = lane-roll of the
            # flat activation by oy*W+ox, masked at the image border, written
            # to a bf16-tile-aligned sublane slab of the merged-K operand.
            for t, (oy, ox) in enumerate(taps):
                s = oy * W + ox
                amt = ((-s) if roll_like_jnp else s) % HW
                tap = xc if s == 0 else pltpu.roll(xc, amt, 1)
                m = None
                for cond in (row_ok[oy], col_ok[ox]):
                    if cond is not None:
                        m = cond if m is None else jnp.logical_and(m, cond)
                if m is not None:
                    tap = jnp.where(m, tap, jnp.zeros_like(tap))
                stage_ref[pl.ds(t * Cc, Cc), :] = tap
            stage_ref[pl.ds(9 * Cc, C - Cc), :] = xu

            # ---- 1x1 conv #1 (3x3 conv + BN scale folded into the weights,
            # single K=k_pad MXU matmul) -> bias -> ReLU -> 1x1 conv #2.
            h = jnp.dot(wm_ref[d], stage_ref[...],
                        preferred_element_type=jnp.float32)        # (Hd, HW)
            h = jnp.maximum(h + bi_ref[d], 0.0)
            out = jnp.dot(w2_ref[d], h.astype(jnp.bfloat16),
                          preferred_element_type=jnp.float32)      # (C, HW)

            # ---- residual: shortcut + mlp(spatial_mixing(x)), in f32
            xf = xf + out

        o_ref[...] = xf.reshape(1, C, HW)

    return kernel


# ------------------------------ JAX wrapper -------------------------------- #
def basic_stage(x_nchw, kernel_params, *, n_div):
    """BasicStage forward. NCHW in / NCHW out; one fused Pallas call."""
    wm, w2, bi = kernel_params
    depth, Hd, k_pad = wm.shape
    N, C, H, W = x_nchw.shape
    Cc = C // n_div
    k_used = 9 * Cc + (C - Cc)
    HW = H * W
    assert k_pad >= k_used and HW % 128 == 0 and C % 8 == 0

    x = x_nchw.reshape(N, C, HW)           # free reshape, no HBM transpose

    kernel = _make_kernel(H, W, C, Cc, Hd, depth, k_used, k_pad,
                          _roll_matches_jnp_semantics())

    out = pl.pallas_call(
        kernel,
        out_shape=jax.ShapeDtypeStruct((N, C, HW), jnp.float32),
        grid=(N,),
        in_specs=[
            pl.BlockSpec((1, C, HW), lambda n: (n, 0, 0)),
            pl.BlockSpec((depth, Hd, k_pad), lambda n: (0, 0, 0)),
            pl.BlockSpec((depth, C, Hd), lambda n: (0, 0, 0)),
            pl.BlockSpec((depth, Hd, 1), lambda n: (0, 0, 0)),
        ],
        out_specs=pl.BlockSpec((1, C, HW), lambda n: (n, 0, 0)),
        scratch_shapes=[pltpu.VMEM((k_pad, HW), jnp.bfloat16)],
        compiler_params=pltpu.CompilerParams(
            dimension_semantics=("parallel",)),
    )(x, wm, w2, bi)

    return out.reshape(N, C, H, W)


# --------------------- deterministic parameter setup ----------------------- #
def init_params(key, dim, n_div, mlp_ratio, depth, eps=1e-5, k_pad=256):
    """Returns (kernel_params, ref_params).

    kernel_params: depth-stacked, bf16, 3x3 conv + BN scale folded into one
                   merged (Hd, k_pad) first-layer weight per block.
    ref_params:    per-block unfolded f32 weights (same bf16-quantized values)
                   for the faithful pure-JAX reference.
    """
    Cc = dim // n_div
    Hd = int(dim * mlp_ratio)
    k_used = 9 * Cc + (dim - Cc)
    assert k_pad >= k_used
    ref_params = []
    wms, w2s, bis = [], [], []
    for i in range(depth):
        k = jax.random.fold_in(key, i)
        k1, k2, k3, k4, k5, k6, k7 = jax.random.split(k, 7)
        # torch layouts: conv weight (out, in, kh, kw)
        w3_t = 0.1 * jax.random.normal(k1, (Cc, Cc, 3, 3), jnp.float32)
        w1_t = 0.1 * jax.random.normal(k2, (Hd, dim, 1, 1), jnp.float32)
        w2_t = 0.1 * jax.random.normal(k3, (dim, Hd, 1, 1), jnp.float32)
        # BatchNorm2d (eval mode) parameters / running stats
        gamma = 1.0 + 0.1 * jax.random.normal(k4, (Hd,), jnp.float32)
        beta = 0.1 * jax.random.normal(k5, (Hd,), jnp.float32)
        rmean = 0.1 * jax.random.normal(k6, (Hd,), jnp.float32)
        rvar = jnp.abs(jax.random.normal(k7, (Hd,), jnp.float32)) + 0.5

        # canonical layouts; bf16-quantized values shared by kernel and ref
        w3 = jnp.transpose(w3_t, (2, 3, 1, 0))                # (3,3,Cc,Cc) HWIO
        w1 = jnp.transpose(w1_t[:, :, 0, 0])                  # (dim, Hd)
        w2 = jnp.transpose(w2_t[:, :, 0, 0])                  # (Hd, dim)
        w3q = w3.astype(jnp.bfloat16).astype(jnp.float32)
        w1q = w1.astype(jnp.bfloat16).astype(jnp.float32)
        w2q = w2.astype(jnp.bfloat16).astype(jnp.float32)
        scale = (gamma * lax.rsqrt(rvar + eps)).reshape(1, Hd)
        bias = (beta - rmean * gamma * lax.rsqrt(rvar + eps)).reshape(1, Hd)
        ref_params.append((w3q, w1q, w2q, scale, bias))

        # exact linear fold: conv output only feeds the MLP, so fold w3 into
        # w1, append the untouched-channel rows, fold the BN scale into the
        # columns, zero-pad K to k_pad and transpose to the (Hd, K) LHS.
        w13 = jnp.einsum("hwio,od->hwid", w3q, w1q[:Cc]).reshape(9 * Cc, Hd)
        wm = jnp.concatenate([w13, w1q[Cc:]], axis=0) * scale   # (k_used, Hd)
        wm = jnp.concatenate(
            [wm, jnp.zeros((k_pad - k_used, Hd), jnp.float32)], axis=0)
        wms.append(wm.T.astype(jnp.bfloat16))                   # (Hd, k_pad)
        w2s.append(w2q.T.astype(jnp.bfloat16))                  # (dim, Hd)
        bis.append(bias.reshape(Hd, 1))                         # (Hd, 1)

    kernel_params = (jnp.stack(wms), jnp.stack(w2s), jnp.stack(bis))
    return kernel_params, ref_params


# --------------------------- pure-JAX reference ----------------------------- #
def ref_block(x, params):
    w3, w1, w2, scale, bias = params
    Cc = w3.shape[2]
    conv = lax.conv_general_dilated(
        x[..., :Cc], w3, window_strides=(1, 1), padding="SAME",
        dimension_numbers=("NHWC", "HWIO", "NHWC"))
    y = jnp.concatenate([conv, x[..., Cc:]], axis=-1)
    h = jnp.einsum("nhwc,cd->nhwd", y, w1)
    h = jnp.maximum(h * scale + bias, 0.0)
    out = jnp.einsum("nhwd,dc->nhwc", h, w2)
    return x + out


def ref_basic_stage(x_nchw, ref_params):
    x = jnp.transpose(x_nchw, (0, 2, 3, 1))
    for params in ref_params:
        x = ref_block(x, params)
    return jnp.transpose(x, (0, 3, 1, 2))


# ---------------------------------- main ----------------------------------- #
if __name__ == "__main__":
    # BasicStage config: dim=64, depth=2, n_div=4, mlp_ratio=2.0,
    # drop_path=[0,0], layer_scale_init_value=0, norm=BatchNorm2d, act=ReLU,
    # pconv_fw_type='split_cat'
    N, C, H, W = 2, 64, 16, 16
    dim, depth, n_div, mlp_ratio = C, 2, 4, 2.0

    key = jax.random.PRNGKey(0)
    kx, kp = jax.random.split(key)
    x_nchw = jax.random.normal(kx, (N, C, H, W), jnp.float32)
    kernel_params, ref_params = init_params(kp, dim, n_div, mlp_ratio, depth)

    out = jax.block_until_ready(
        basic_stage(x_nchw, kernel_params, n_div=n_div))
    ref = jax.block_until_ready(ref_basic_stage(x_nchw, ref_params))

    assert out.shape == (N, C, H, W)
    # Kernel matmuls use bf16 operands with f32 accumulation (reference is f32
    # compute on the same bf16-quantized weights) -> loosened tolerance.
    max_err = float(jnp.max(jnp.abs(out - ref)))
    assert jnp.allclose(out, ref, rtol=5e-2, atol=5e-2), max_err
    print("KERNEL_OK")
</pallas_src>

<mosaic_0001>
module attributes {stable_mosaic.version = 11 : i64} {
  func.func @k(%arg0: memref<8x128xf32, #tpu.memory_space<vmem>>, %arg1: memref<8x128xf32, #tpu.memory_space<vmem>>) attributes {dimension_semantics = [], scalar_prefetch = 0 : i64, scratch_operands = 0 : i64, tpu.core_type = #tpu.core_type<tc>} {
    %c0 = arith.constant 0 : index
    %c0_0 = arith.constant 0 : index
    %0 = vector.load %arg0[%c0, %c0_0] : memref<8x128xf32, #tpu.memory_space<vmem>>, vector<8x128xf32>
    %c1_i32 = arith.constant 1 : i32
    %1 = tpu.dynamic_rotate %0 by %c1_i32 dim 1 : vector<8x128xf32>, i32 -> vector<8x128xf32>
    %c0_1 = arith.constant 0 : index
    %c0_2 = arith.constant 0 : index
    %2 = vector.load %arg1[%c0_1, %c0_2] : memref<8x128xf32, #tpu.memory_space<vmem>>, vector<8x128xf32>
    tpu.vector_store %arg1[%c0_1, %c0_2], %1 {strides = array<i32>} : memref<8x128xf32, #tpu.memory_space<vmem>>, vector<8x128xf32>,
    return
  }
}

</mosaic_0001>

<llo_original>
// kernel: tpu_custom_call.1
$region0: #{tpu_custom_call.1}
  #allocation0 [shape = 'u32[]', space=smem, size = 0x4, offset = 0x4, fixed_abs, tag = 'smem constant byte address 0x4 - core index']
  #allocation1 [shape = 'u32[72,128]{1,0:T(1,128)}', space=vmem, size = 0x9000, scoped, tag = 'internal scratch']
  %s0 = inlined_call_operand.hbm [shape: f32[8,128], index: 0, kind: input, shape index: {}]
  %s1 = inlined_call_operand.hbm [shape: f32[8,128], index: 1, kind: output, shape index: {}]
  %s2 = sld [smem:[#allocation0]]
  $region18: #{tpu_custom_call.1} parent=0
    _
  %s4 = ssub.s32 1, %s2
  %s5 = scalar_select 0, %s4, %s2
  $region1: #{tpu_custom_call.1} parent=0
    #allocation2 [shape = 'u8[4096]{0}', space=vmem, size = 0x1000, scoped, tag = 'input window, operand 0, single buffered']
    #allocation3 [shape = 's32[1]{0}', space=sflag, size = 0x4, scoped, tag = 'scoped memory for tpu_custom_call.1']
    #allocation4 [shape = 's32[1]{0}', space=sflag, size = 0x4, scoped, tag = 'scoped memory for tpu_custom_call.1']
    #allocation5 [shape = 'u8[4096]{0}', space=vmem, size = 0x1000, scoped, tag = 'output window, operand 0, single buffered']
    %6 = vsyncpa [#allocation3], 0
    %7 = vsyncpa [#allocation4], 0
    // Predicated region
    $region2: #{tpu_custom_call.1} parent=1 // pred_check
      _
    $region3: #{tpu_custom_call.1} parent=1 // pred_check_branch
      %9 = sbr.rel (0) target = $region5
    $region4: #{tpu_custom_call.1} parent=1 // pred_region
      %11 = vsyncadd [#allocation3], 0
      %s13 = sshll.u32 %s0, 4
      %s14 = int_to_ptr.hbm [resolvable:$true] %s13
      %s15 = sshll.u32 [#allocation2], 4
      %s16 = int_to_ptr.vmem [resolvable:$true] %s15
      %18 = dma.hbm_to_vmem [thread:$0]  %s14, 128, %s16, [#allocation3]
    $region5: #{tpu_custom_call.1} parent=1 // pred_fallthru
      _
    // Predicated region
    $region6: #{tpu_custom_call.1} parent=1 // pred_check
      _
    $region7: #{tpu_custom_call.1} parent=1 // pred_check_branch
      %20 = sbr.rel (0) target = $region9
    $region8: #{tpu_custom_call.1} parent=1 // pred_region
      %22 = dma.done [#allocation3], 128
    $region9: #{tpu_custom_call.1} parent=1 // pred_fallthru
      _
    %v23 = vld [vmem:[#allocation2] sm:$0xff]
    %24 = vrot.lane.b32.xlu0 %v23, 1
    %v25 = vpop.permute.xlu0 %24
    %26 = vst [vmem:[#allocation5] sm:$0xff] %v25
    // Predicated region
    $region10: #{tpu_custom_call.1} parent=1 // pred_check
      _
    $region11: #{tpu_custom_call.1} parent=1 // pred_check_branch
      %28 = sbr.rel (0) target = $region13
    $region12: #{tpu_custom_call.1} parent=1 // pred_region
      %30 = vsyncadd [#allocation4], 0
      %s32 = sshll.u32 [#allocation5], 4
      %s33 = int_to_ptr.vmem [resolvable:$true] %s32
      %s34 = sshll.u32 %s1, 4
      %s35 = int_to_ptr.hbm [resolvable:$true] %s34
      %37 = dma.vmem_to_hbm [thread:$0]  %s33, 128, %s35, [#allocation4]
    $region13: #{tpu_custom_call.1} parent=1 // pred_fallthru
      _
    // Predicated region
    $region14: #{tpu_custom_call.1} parent=1 // pred_check
      _
    $region15: #{tpu_custom_call.1} parent=1 // pred_check_branch
      %39 = sbr.rel (0) target = $region17
    $region16: #{tpu_custom_call.1} parent=1 // pred_region
      %41 = dma.done [#allocation4], 128
    $region17: #{tpu_custom_call.1} parent=1 // pred_fallthru
      _
    %42 = vsyncpa [#allocation3], 1
    %43 = vsyncpa [#allocation4], 1

</llo_original>
